<compile_context>
chip_gen: v7x
topology: tpu7x:2x2x1
jax: 0.10.0
libtpu: 0.0.40
codegen_flags: <defaults>
</compile_context>

<pallas_src>
from functools import partial

import jax
import jax.numpy as jnp
import numpy as np
from jax.experimental import pallas as pl
from jax.experimental.pallas import tpu as pltpu


def _rup(a, m):
    """Round `a` up to a multiple of `m`."""
    return -(-a // m) * m


def _pick_row_tile(H, W, target_lanes=1024):
    """Pick an output-row tile TH (a divisor of H).

    The flattened band TH*W must be a multiple of 128 lanes (lane-dense output
    block).  Prefer >= 2 bands so the grid has parallel work for both v7x
    TensorCores, and a lane count near `target_lanes` (measured sweet spot for
    HBM-bound tiles; pass ~2048 on v7x where per-band DMA is cheaper).
    """
    best_th, best_score = None, None
    for th in range(1, H + 1):
        if H % th or H // th < 2 or (th * W) % 128:
            continue
        score = abs(th * W - target_lanes)
        if best_score is None or score < best_score:
            best_th, best_score = th, score
    if best_th is not None:
        return best_th
    # Fallback: one band per image (block == full dims is always legal).
    # TODO(synk): pad H*W up to a multiple of 128 (or split along W) so there
    # are always >= 2 lane-dense bands per batch for the two v7x TensorCores.
    return H


def _vmem_needed_bytes(band, Wp, cin2, TH, W, K, cout2, in_bytes):
    """Per-grid-step VMEM need, including (8,128)-tile padding and the im2col
    intermediates (review #3)."""
    kk = K * K
    lane_in = _rup(cin2, 128)
    inp = 2 * band * _rup(Wp, 8) * lane_in * in_bytes            # double-buffered band
    wgt = 1 * _rup(cout2, 8) * _rup(kk * cin2, 128) * in_bytes   # Buffered(1) resident
    bias = _rup(cout2, 8) * 128 * 4
    outb = 2 * _rup(cout2, 8) * _rup(TH * W, 128) * 4            # double-buffered out
    slices = kk * _rup(TH * W, 8) * lane_in * in_bytes           # im2col slice temps
    patches = _rup(TH * W, 8) * _rup(kk * cin2, 128) * in_bytes
    acc = _rup(cout2, 8) * _rup(TH * W, 128) * 4
    return inp + wgt + bias + outb + slices + patches + acc


def _resident_block_spec(block_shape, index_map):
    """BlockSpec for grid-constant operands: single-buffer them (the block index
    never changes so re-DMA is already skipped; a second buffer only burns VMEM)."""
    try:
        return pl.BlockSpec(block_shape, index_map, pipeline_mode=pl.Buffered(1))
    except Exception:  # older jax without pipeline_mode / Buffered
        return pl.BlockSpec(block_shape, index_map)


def _conv_block_kernel(x_ref, w_ref, b_ref, o_ref, *, TH, W, K, cin2):
    """One (batch, row-band) grid step.

    x_ref: (TH+K-1, Wp, 2*Cin)  pre-extracted padded row band (real|imag on channels)
    w_ref: (2*Cout, K*K*2*Cin)  lane-dense weight slab, contraction order (ky, kx, c)
    b_ref: (2*Cout, 1)          packed bias, f32
    o_ref: (2*Cout, TH*W)       lane-dense output band (rows [hb*TH, hb*TH+TH)), f32
    """
    # ConvBlock pre-conv: norm='none' (identity) then ReLU on real & imag parts
    # (stacked on channels; relu(0)=0 keeps the zero halo/padding valid).
    xb = jnp.maximum(x_ref[...], 0.0).astype(x_ref.dtype)        # (TH+K-1, Wp, 2Cin)

    # im2col patch matrix: (TH*W, K*K*2*Cin); column order (ky, kx, c) matches
    # the weight slab.  Each reshape keeps the minor (channel) dim unchanged.
    # TODO(synk): for very small 2*Cin, pre-pack (kx, c) into the lane dim (or
    # realize the kx shift with pltpu.roll) and pad the contraction to 128 to
    # cut the K*K unaligned repacks / lane waste (review #5).
    cols = [
        xb[ky:ky + TH, kx:kx + W, :].reshape(TH * W, cin2)
        for ky in range(K) for kx in range(K)
    ]
    patches = jnp.concatenate(cols, axis=1)                      # (TH*W, K*K*2Cin)

    # Single deep MXU matmul (A @ B^T, both contracting on the minor dim),
    # f32 accumulation, lane-dense (2*Cout, TH*W) result.
    acc = jax.lax.dot_general(
        w_ref[...], patches,
        dimension_numbers=(((1,), (1,)), ((), ())),
        preferred_element_type=jnp.float32)
    o_ref[...] = acc + b_ref[...]


def conv_block_forward(x_complex, w_r, w_i, b_r, b_i, kernel_size,
                       *, use_bf16=False, target_lanes=1024):
    """ConvBlock forward (norm='none' -> relu -> ComplexConv2d).

    x_complex: (N, Cin, H, W) complex64   (NCHW, PyTorch convention)
    w_r, w_i : (K, K, Cin, Cout) float32  (HWIO weights of conv_r / conv_i)
    b_r, b_i : (Cout,) float32
    use_bf16 : feed the MXU bf16 operands (f32 accumulation) -> halves HBM/VMEM
               traffic; validate with a looser tolerance.
    returns  : (N, Cout, H, W) complex64
    """
    N, Cin, H, W = x_complex.shape
    K = int(kernel_size)
    if K % 2 != 1:
        raise ValueError("ConvBlock 'same' padding assumes odd kernel_size")
    pad = (K - 1) // 2
    Cout = w_r.shape[-1]
    cin2, cout2 = 2 * Cin, 2 * Cout
    Hp, Wp = H + 2 * pad, W + 2 * pad
    kk = K * K
    in_dtype = jnp.bfloat16 if use_bf16 else jnp.float32
    in_bytes = 2 if use_bf16 else 4

    TH = _pick_row_tile(H, W, target_lanes)
    n_bands = H // TH
    band = TH + K - 1

    # ---- Input prep: pack real|imag on channels, channels-last, pad, then
    # pre-extract overlapping row bands with a (K-1) halo so BlockSpec tiles
    # them NON-overlapping (review #1).  XLA fuses pack+transpose+pad+gather
    # into one pass producing x_bands (review #2).
    x = jnp.concatenate([jnp.real(x_complex), jnp.imag(x_complex)], axis=1)
    x = jnp.transpose(x, (0, 2, 3, 1)).astype(in_dtype)          # (N, H, W, 2Cin)
    x = jnp.pad(x, ((0, 0), (pad, pad), (pad, pad), (0, 0)))     # (N, Hp, Wp, 2Cin)
    rows = (jnp.arange(n_bands, dtype=jnp.int32)[:, None] * TH
            + jnp.arange(band, dtype=jnp.int32)[None, :])        # (n_bands, band)
    x_bands = x[:, rows]                                         # (N, n_bands, band, Wp, 2Cin)
    # TODO(synk): a zero-extra-HBM-pass variant keeps x in HBM
    # (memory_space=pl.ANY) and make_async_copy's each halo'd band into a
    # double-buffered VMEM scratch inside the kernel.

    # ---- Pack the complex conv as one real conv with 2*Cin in / 2*Cout out:
    #   real-input rows -> [ W_r |  W_i ],  imag-input rows -> [ -W_i | W_r ]
    # then flatten to a lane-dense 2-D slab with contraction order (ky, kx, c).
    w4 = jnp.concatenate(
        [jnp.concatenate([w_r, w_i], axis=-1),
         jnp.concatenate([-w_i, w_r], axis=-1)], axis=2)          # (K, K, 2Cin, 2Cout)
    w_slab = (jnp.transpose(w4, (3, 0, 1, 2))
              .reshape(cout2, kk * cin2).astype(in_dtype))
    bias = jnp.concatenate([b_r - b_i, b_r + b_i]).reshape(cout2, 1).astype(jnp.float32)
    # TODO(synk): for production Cout where 2*Cout exceeds the native MXU dim
    # (256 on v6e/v7x, 128 on v5e), add an output-channel grid axis and block
    # cout2 so the resident weight slab / accumulator stay bounded (review #8).

    # ---- VMEM budget (review #3): block bytes incl. im2col intermediates,
    # 2x headroom, capped at physical VMEM minus 16 MiB (48 MiB on v7x).
    need = _vmem_needed_bytes(band, Wp, cin2, TH, W, K, cout2, in_bytes)
    try:
        phys = int(getattr(pltpu.get_tpu_info(), "vmem_capacity_bytes", 64 << 20))
    except Exception:
        phys = 64 << 20                                           # v7x is the tightest
    cap = max(phys - (16 << 20), 32 << 20)
    vmem_limit = int(min(cap, max(32 << 20, 2 * need)))

    flops = 2 * N * H * W * cout2 * kk * cin2
    bytes_accessed = (x_bands.size * in_bytes + w_slab.size * in_bytes
                      + bias.size * 4 + N * cout2 * H * W * 4)
    cost = pl.CostEstimate(flops=flops, transcendentals=0,
                           bytes_accessed=bytes_accessed)

    kernel = partial(_conv_block_kernel, TH=TH, W=W, K=K, cin2=cin2)
    out = pl.pallas_call(
        kernel,
        out_shape=jax.ShapeDtypeStruct((N, cout2, H * W), jnp.float32),
        grid=(N, n_bands),
        in_specs=[
            # Per-step input block is one halo'd row band, auto double-buffered.
            pl.BlockSpec((None, None, band, Wp, cin2),
                         lambda n, hb: (n, hb, 0, 0, 0)),
            # Grid-constant operands: resident, single-buffered (review #4).
            _resident_block_spec((cout2, kk * cin2), lambda n, hb: (0, 0)),
            _resident_block_spec((cout2, 1), lambda n, hb: (0, 0)),
        ],
        out_specs=pl.BlockSpec((None, cout2, TH * W), lambda n, hb: (n, 0, hb)),
        compiler_params=pltpu.CompilerParams(
            dimension_semantics=("parallel", "parallel"),
            vmem_limit_bytes=vmem_limit),
        cost_estimate=cost,
    )(x_bands, w_slab, bias)

    out = out.reshape(N, cout2, H, W)                             # free reshape
    return jax.lax.complex(out[:, :Cout], out[:, Cout:])


# TODO(synk): norm_type='instance'/'batch', act_type='leaky_relu' and the
# real-valued (is_complex=False) branch of ConvBlock are not implemented here;
# the defaults exercised by the module (norm='none', act='relu', complex conv) are.


def _reference(x_complex, w_r, w_i, b_r, b_i, kernel_size):
    """Pure-JAX reference mirroring the PyTorch ConvBlock exactly."""
    pad = (kernel_size - 1) // 2

    def conv(x_nchw, w_hwio, b):
        y = jax.lax.conv_general_dilated(
            x_nchw, w_hwio, window_strides=(1, 1),
            padding=((pad, pad), (pad, pad)),
            dimension_numbers=("NCHW", "HWIO", "NCHW"))
        return y + b[None, :, None, None]

    xr = jax.nn.relu(jnp.real(x_complex))   # norm='none' -> relu (per component)
    xi = jax.nn.relu(jnp.imag(x_complex))
    out_real = conv(xr, w_r, b_r) - conv(xi, w_i, b_i)
    out_imag = conv(xi, w_r, b_r) + conv(xr, w_i, b_i)
    return jax.lax.complex(out_real, out_imag)


if __name__ == "__main__":
    # Small shapes consistent with the module: NCHW complex64 input.
    N, Cin, Cout, H, W, K = 2, 4, 4, 16, 16, 3

    key = jax.random.PRNGKey(0)
    k1, k2, k3, k4, k5, k6 = jax.random.split(key, 6)

    x = jax.lax.complex(jax.random.normal(k1, (N, Cin, H, W), jnp.float32),
                        jax.random.normal(k2, (N, Cin, H, W), jnp.float32))

    scale = 1.0 / np.sqrt(Cin * K * K)
    w_r = jax.random.normal(k3, (K, K, Cin, Cout), jnp.float32) * scale
    w_i = jax.random.normal(k4, (K, K, Cin, Cout), jnp.float32) * scale
    b_r = jax.random.normal(k5, (Cout,), jnp.float32) * scale
    b_i = jax.random.normal(k6, (Cout,), jnp.float32) * scale

    fwd = jax.jit(conv_block_forward,
                  static_argnames=("kernel_size", "use_bf16", "target_lanes"))

    ref = jax.block_until_ready(_reference(x, w_r, w_i, b_r, b_i, K))

    # f32 operand path.  Tolerance covers the worst case where XLA's conv
    # (reference) and Mosaic's MXU use different default f32 matmul precisions
    # (single-pass bf16 vs multi-pass); with matched precision they agree ~1e-6.
    out = jax.block_until_ready(fwd(x, w_r, w_i, b_r, b_i, kernel_size=K))
    np.testing.assert_allclose(np.asarray(out), np.asarray(ref),
                               rtol=3e-2, atol=3e-2)
    assert out.shape == (N, Cout, H, W) and out.dtype == jnp.complex64

    # bf16 MXU operand path (halved HBM/VMEM traffic), f32 accumulation:
    # validated against the f32 reference at a bf16-quantization tolerance.
    out_bf16 = jax.block_until_ready(
        fwd(x, w_r, w_i, b_r, b_i, kernel_size=K, use_bf16=True))
    np.testing.assert_allclose(np.asarray(out_bf16), np.asarray(ref),
                               rtol=6e-2, atol=6e-2)
    assert out_bf16.shape == (N, Cout, H, W) and out_bf16.dtype == jnp.complex64

    print("KERNEL_OK")
</pallas_src>

<mosaic_0001>
module attributes {stable_mosaic.version = 11 : i64} {
  func.func @_conv_block_kernel(%arg0: i32, %arg1: i32, %arg2: memref<1x1x10x18x8xf32, #tpu.memory_space<vmem>>, %arg3: memref<8x72xf32, #tpu.memory_space<vmem>>, %arg4: memref<8x1xf32, #tpu.memory_space<vmem>>, %arg5: memref<1x8x128xf32, #tpu.memory_space<vmem>>) attributes {dimension_semantics = [#tpu.dimension_semantics<parallel>, #tpu.dimension_semantics<parallel>], iteration_bounds = array<i64: 2, 2>, scalar_prefetch = 0 : i64, scratch_operands = 0 : i64, tpu.core_type = #tpu.core_type<tc>, window_params = [{transform_indices = @transform_0, window_bounds = array<i64: 1, 1, 10, 18, 8>}, {pipeline_mode = #tpu.pipeline_mode<synchronous>, transform_indices = @transform_1, window_bounds = array<i64: 8, 72>}, {pipeline_mode = #tpu.pipeline_mode<synchronous>, transform_indices = @transform_2, window_bounds = array<i64: 8, 1>}, {transform_indices = @transform_3, window_bounds = array<i64: 1, 8, 128>}]} {
    %c0 = arith.constant 0 : index
    %c0_0 = arith.constant 0 : index
    %c0_1 = arith.constant 0 : index
    %c0_2 = arith.constant 0 : index
    %c0_3 = arith.constant 0 : index
    %0 = vector.load %arg2[%c0, %c0_0, %c0_1, %c0_2, %c0_3] : memref<1x1x10x18x8xf32, #tpu.memory_space<vmem>>, vector<1x1x10x18x8xf32>
    %1 = vector.shape_cast %0 : vector<1x1x10x18x8xf32> to vector<10x18x8xf32>
    %cst = arith.constant 0.000000e+00 : f32
    %2 = vector.broadcast %cst : f32 to vector<10x18x8xf32>
    %3 = arith.maximumf %1, %2 : vector<10x18x8xf32>
    %4 = vector.extract_strided_slice %3 {offsets = [0, 0, 0], sizes = [8, 16, 8], strides = [1, 1, 1]} : vector<10x18x8xf32> to vector<8x16x8xf32>
    %5 = vector.shape_cast %4 : vector<8x16x8xf32> to vector<128x8xf32>
    %6 = vector.extract_strided_slice %3 {offsets = [0, 1, 0], sizes = [8, 16, 8], strides = [1, 1, 1]} : vector<10x18x8xf32> to vector<8x16x8xf32>
    %7 = vector.shape_cast %6 : vector<8x16x8xf32> to vector<128x8xf32>
    %8 = vector.extract_strided_slice %3 {offsets = [0, 2, 0], sizes = [8, 16, 8], strides = [1, 1, 1]} : vector<10x18x8xf32> to vector<8x16x8xf32>
    %9 = vector.shape_cast %8 : vector<8x16x8xf32> to vector<128x8xf32>
    %10 = vector.extract_strided_slice %3 {offsets = [1, 0, 0], sizes = [8, 16, 8], strides = [1, 1, 1]} : vector<10x18x8xf32> to vector<8x16x8xf32>
    %11 = vector.shape_cast %10 : vector<8x16x8xf32> to vector<128x8xf32>
    %12 = vector.extract_strided_slice %3 {offsets = [1, 1, 0], sizes = [8, 16, 8], strides = [1, 1, 1]} : vector<10x18x8xf32> to vector<8x16x8xf32>
    %13 = vector.shape_cast %12 : vector<8x16x8xf32> to vector<128x8xf32>
    %14 = vector.extract_strided_slice %3 {offsets = [1, 2, 0], sizes = [8, 16, 8], strides = [1, 1, 1]} : vector<10x18x8xf32> to vector<8x16x8xf32>
    %15 = vector.shape_cast %14 : vector<8x16x8xf32> to vector<128x8xf32>
    %16 = vector.extract_strided_slice %3 {offsets = [2, 0, 0], sizes = [8, 16, 8], strides = [1, 1, 1]} : vector<10x18x8xf32> to vector<8x16x8xf32>
    %17 = vector.shape_cast %16 : vector<8x16x8xf32> to vector<128x8xf32>
    %18 = vector.extract_strided_slice %3 {offsets = [2, 1, 0], sizes = [8, 16, 8], strides = [1, 1, 1]} : vector<10x18x8xf32> to vector<8x16x8xf32>
    %19 = vector.shape_cast %18 : vector<8x16x8xf32> to vector<128x8xf32>
    %20 = vector.extract_strided_slice %3 {offsets = [2, 2, 0], sizes = [8, 16, 8], strides = [1, 1, 1]} : vector<10x18x8xf32> to vector<8x16x8xf32>
    %21 = vector.shape_cast %20 : vector<8x16x8xf32> to vector<128x8xf32>
    %22 = tpu.concatenate %5, %7, %9, %11, %13, %15, %17, %19, %21 in 1 : vector<128x8xf32>, vector<128x8xf32>, vector<128x8xf32>, vector<128x8xf32>, vector<128x8xf32>, vector<128x8xf32>, vector<128x8xf32>, vector<128x8xf32>, vector<128x8xf32> -> vector<128x72xf32>
    %c0_4 = arith.constant 0 : index
    %c0_5 = arith.constant 0 : index
    %23 = vector.load %arg3[%c0_4, %c0_5] : memref<8x72xf32, #tpu.memory_space<vmem>>, vector<8x72xf32>
    %cst_6 = arith.constant dense<0.000000e+00> : vector<8x128xf32>
    %24 = tpu.matmul %23, %22, %cst_6 {dimension_numbers = #tpu.dot_dimension_numbers<[1], [1], [0], [0], [0, 0, 1, 0], [], []>} : vector<8x72xf32>, vector<128x72xf32>, vector<8x128xf32> -> vector<8x128xf32>
    %c0_7 = arith.constant 0 : index
    %c0_8 = arith.constant 0 : index
    %25 = vector.load %arg4[%c0_7, %c0_8] : memref<8x1xf32, #tpu.memory_space<vmem>>, vector<8x1xf32>
    %26 = vector.broadcast %25 : vector<8x1xf32> to vector<8x128xf32>
    %27 = arith.addf %24, %26 : vector<8x128xf32>
    %c0_9 = arith.constant 0 : index
    %c0_10 = arith.constant 0 : index
    %c0_11 = arith.constant 0 : index
    %28 = vector.load %arg5[%c0_9, %c0_10, %c0_11] : memref<1x8x128xf32, #tpu.memory_space<vmem>>, vector<1x8x128xf32>
    %29 = vector.shape_cast %28 : vector<1x8x128xf32> to vector<8x128xf32>
    %30 = vector.shape_cast %27 : vector<8x128xf32> to vector<1x8x128xf32>
    tpu.vector_store %arg5[%c0_9, %c0_10, %c0_11], %30 {strides = array<i32>} : memref<1x8x128xf32, #tpu.memory_space<vmem>>, vector<1x8x128xf32>,
    return
  }
  func.func @transform_0(%arg0: i32, %arg1: i32) -> (i32, i32, i32, i32, i32) {
    %c0_i32 = arith.constant 0 : i32
    %c0_i32_0 = arith.constant 0 : i32
    %c0_i32_1 = arith.constant 0 : i32
    %c0_i32_2 = arith.constant 0 : i32
    return %arg0, %arg1, %c0_i32, %c0_i32_0, %c0_i32_1 : i32, i32, i32, i32, i32
  }
  func.func @transform_1(%arg0: i32, %arg1: i32) -> (i32, i32) {
    %c0_i32 = arith.constant 0 : i32
    %c0_i32_0 = arith.constant 0 : i32
    %c0_i32_1 = arith.constant 0 : i32
    return %c0_i32, %c0_i32_0 : i32, i32
  }
  func.func @transform_2(%arg0: i32, %arg1: i32) -> (i32, i32) {
    %c0_i32 = arith.constant 0 : i32
    %c0_i32_0 = arith.constant 0 : i32
    %c0_i32_1 = arith.constant 0 : i32
    return %c0_i32, %c0_i32_0 : i32, i32
  }
  func.func @transform_3(%arg0: i32, %arg1: i32) -> (i32, i32, i32) {
    %c0_i32 = arith.constant 0 : i32
    %c0_i32_0 = arith.constant 0 : i32
    return %arg0, %c0_i32, %arg1 : i32, i32, i32
  }
}

</mosaic_0001>

<llo_original>
// kernel: custom-call.1
$region0: #{custom-call.1}
  %s0 = inlined_call_operand.vmem [shape: c64[2,4,16,16], index: 0, kind: input, shape index: {}]
  %s1 = inlined_call_operand.vmem [shape: f32[2,4,16,16], index: 1, kind: output, shape index: {}]
  %s2 = scalar_lea.vmem %s0, 128
  %v3 = vld [vmem:[%s2] sm:$0xff]
  %4 = vst [vmem:[%s1] sm:$0xff] %v3
  %s5 = scalar_lea.vmem %s1, 8
  %s6 = scalar_lea.vmem %s2, 8
  %v7 = vld [vmem:[%s6] sm:$0xff]
  %8 = vst [vmem:[%s5] sm:$0xff] %v7
  %s9 = scalar_lea.vmem %s1, 16
  %s10 = scalar_lea.vmem %s2, 16
  %v11 = vld [vmem:[%s10] sm:$0xff]
  %12 = vst [vmem:[%s9] sm:$0xff] %v11
  %s13 = scalar_lea.vmem %s1, 24
  %s14 = scalar_lea.vmem %s2, 24
  %v15 = vld [vmem:[%s14] sm:$0xff]
  %16 = vst [vmem:[%s13] sm:$0xff] %v15
  %s17 = scalar_lea.vmem %s1, 32
  %s18 = scalar_lea.vmem %s2, 32
  %v19 = vld [vmem:[%s18] sm:$0xff]
  %20 = vst [vmem:[%s17] sm:$0xff] %v19
  %s21 = scalar_lea.vmem %s1, 40
  %s22 = scalar_lea.vmem %s2, 40
  %v23 = vld [vmem:[%s22] sm:$0xff]
  %24 = vst [vmem:[%s21] sm:$0xff] %v23
  %s25 = scalar_lea.vmem %s1, 48
  %s26 = scalar_lea.vmem %s2, 48
  %v27 = vld [vmem:[%s26] sm:$0xff]
  %28 = vst [vmem:[%s25] sm:$0xff] %v27
  %s29 = scalar_lea.vmem %s1, 56
  %s30 = scalar_lea.vmem %s2, 56
  %v31 = vld [vmem:[%s30] sm:$0xff]
  %32 = vst [vmem:[%s29] sm:$0xff] %v31
  %s33 = scalar_lea.vmem %s1, 64
  %s34 = scalar_lea.vmem %s2, 64
  %v35 = vld [vmem:[%s34] sm:$0xff]
  %36 = vst [vmem:[%s33] sm:$0xff] %v35
  %s37 = scalar_lea.vmem %s1, 72
  %s38 = scalar_lea.vmem %s2, 72
  %v39 = vld [vmem:[%s38] sm:$0xff]
  %40 = vst [vmem:[%s37] sm:$0xff] %v39
  %s41 = scalar_lea.vmem %s1, 80
  %s42 = scalar_lea.vmem %s2, 80
  %v43 = vld [vmem:[%s42] sm:$0xff]
  %44 = vst [vmem:[%s41] sm:$0xff] %v43
  %s45 = scalar_lea.vmem %s1, 88
  %s46 = scalar_lea.vmem %s2, 88
  %v47 = vld [vmem:[%s46] sm:$0xff]
  %48 = vst [vmem:[%s45] sm:$0xff] %v47
  %s49 = scalar_lea.vmem %s1, 96
  %s50 = scalar_lea.vmem %s2, 96
  %v51 = vld [vmem:[%s50] sm:$0xff]
  %52 = vst [vmem:[%s49] sm:$0xff] %v51
  %s53 = scalar_lea.vmem %s1, 104
  %s54 = scalar_lea.vmem %s2, 104
  %v55 = vld [vmem:[%s54] sm:$0xff]
  %56 = vst [vmem:[%s53] sm:$0xff] %v55
  %s57 = scalar_lea.vmem %s1, 112
  %s58 = scalar_lea.vmem %s2, 112
  %v59 = vld [vmem:[%s58] sm:$0xff]
  %60 = vst [vmem:[%s57] sm:$0xff] %v59
  %s61 = scalar_lea.vmem %s1, 120
  %s62 = scalar_lea.vmem %s2, 120
  %v63 = vld [vmem:[%s62] sm:$0xff]
  %64 = vst [vmem:[%s61] sm:$0xff] %v63

// kernel: custom-call
$region0: #{custom-call}
  %s0 = inlined_call_operand.vmem [shape: c64[2,4,16,16], index: 0, kind: input, shape index: {}]
  %s1 = inlined_call_operand.vmem [shape: f32[2,4,16,16], index: 1, kind: output, shape index: {}]
  %v2 = vld [vmem:[%s0] sm:$0xff]
  %3 = vst [vmem:[%s1] sm:$0xff] %v2
  %s4 = scalar_lea.vmem %s1, 8
  %s5 = scalar_lea.vmem %s0, 8
  %v6 = vld [vmem:[%s5] sm:$0xff]
  %7 = vst [vmem:[%s4] sm:$0xff] %v6
  %s8 = scalar_lea.vmem %s1, 16
  %s9 = scalar_lea.vmem %s0, 16
  %v10 = vld [vmem:[%s9] sm:$0xff]
  %11 = vst [vmem:[%s8] sm:$0xff] %v10
  %s12 = scalar_lea.vmem %s1, 24
  %s13 = scalar_lea.vmem %s0, 24
  %v14 = vld [vmem:[%s13] sm:$0xff]
  %15 = vst [vmem:[%s12] sm:$0xff] %v14
  %s16 = scalar_lea.vmem %s1, 32
  %s17 = scalar_lea.vmem %s0, 32
  %v18 = vld [vmem:[%s17] sm:$0xff]
  %19 = vst [vmem:[%s16] sm:$0xff] %v18
  %s20 = scalar_lea.vmem %s1, 40
  %s21 = scalar_lea.vmem %s0, 40
  %v22 = vld [vmem:[%s21] sm:$0xff]
  %23 = vst [vmem:[%s20] sm:$0xff] %v22
  %s24 = scalar_lea.vmem %s1, 48
  %s25 = scalar_lea.vmem %s0, 48
  %v26 = vld [vmem:[%s25] sm:$0xff]
  %27 = vst [vmem:[%s24] sm:$0xff] %v26
  %s28 = scalar_lea.vmem %s1, 56
  %s29 = scalar_lea.vmem %s0, 56
  %v30 = vld [vmem:[%s29] sm:$0xff]
  %31 = vst [vmem:[%s28] sm:$0xff] %v30
  %s32 = scalar_lea.vmem %s1, 64
  %s33 = scalar_lea.vmem %s0, 64
  %v34 = vld [vmem:[%s33] sm:$0xff]
  %35 = vst [vmem:[%s32] sm:$0xff] %v34
  %s36 = scalar_lea.vmem %s1, 72
  %s37 = scalar_lea.vmem %s0, 72
  %v38 = vld [vmem:[%s37] sm:$0xff]
  %39 = vst [vmem:[%s36] sm:$0xff] %v38
  %s40 = scalar_lea.vmem %s1, 80
  %s41 = scalar_lea.vmem %s0, 80
  %v42 = vld [vmem:[%s41] sm:$0xff]
  %43 = vst [vmem:[%s40] sm:$0xff] %v42
  %s44 = scalar_lea.vmem %s1, 88
  %s45 = scalar_lea.vmem %s0, 88
  %v46 = vld [vmem:[%s45] sm:$0xff]
  %47 = vst [vmem:[%s44] sm:$0xff] %v46
  %s48 = scalar_lea.vmem %s1, 96
  %s49 = scalar_lea.vmem %s0, 96
  %v50 = vld [vmem:[%s49] sm:$0xff]
  %51 = vst [vmem:[%s48] sm:$0xff] %v50
  %s52 = scalar_lea.vmem %s1, 104
  %s53 = scalar_lea.vmem %s0, 104
  %v54 = vld [vmem:[%s53] sm:$0xff]
  %55 = vst [vmem:[%s52] sm:$0xff] %v54
  %s56 = scalar_lea.vmem %s1, 112
  %s57 = scalar_lea.vmem %s0, 112
  %v58 = vld [vmem:[%s57] sm:$0xff]
  %59 = vst [vmem:[%s56] sm:$0xff] %v58
  %s60 = scalar_lea.vmem %s1, 120
  %s61 = scalar_lea.vmem %s0, 120
  %v62 = vld [vmem:[%s61] sm:$0xff]
  %63 = vst [vmem:[%s60] sm:$0xff] %v62

// kernel: neg.1
$region0: #{neg.1}
  #allocation0 [shape = 's32[1]{0}', space=sflag, size = 0x4, scoped, tag = 'scoped memory for neg.1']
  %s0 = inlined_call_operand.vmem [shape: f32[3,3,4,4], index: 0, kind: input, shape index: {}]
  %s1 = inlined_call_operand.vmem [shape: f32[3,3,4,4], index: 1, kind: output, shape index: {}]
  %v2 = vld [vmem:[%s0] sm:$0xf]
  %3 = xla_tuple %v2
  %4 = xla_tuple %3
  %v5 = vxor.u32 %v2, 2147483648
  %6 = xla_tuple %v5
  %7 = vst [vmem:[%s1] sm:$0xf] %v5
  %s8 = scalar_lea.vmem %s0, 12
  %v9 = vld [vmem:[%s8] sm:$0xf]
  %10 = xla_tuple %v9
  %11 = xla_tuple %10
  %v12 = vxor.u32 %v9, 2147483648
  %13 = xla_tuple %v12
  %s14 = scalar_lea.vmem %s1, 12
  %15 = vst [vmem:[%s14] sm:$0xf] %v12
  %s16 = scalar_lea.vmem %s0, 24
  %v17 = vld [vmem:[%s16] sm:$0xf]
  %18 = xla_tuple %v17
  %19 = xla_tuple %18
  %v20 = vxor.u32 %v17, 2147483648
  %21 = xla_tuple %v20
  %s22 = scalar_lea.vmem %s1, 24
  %23 = vst [vmem:[%s22] sm:$0xf] %v20
  %s24 = scalar_lea.vmem %s0, 4
  %v25 = vld [vmem:[%s24] sm:$0xf]
  %26 = xla_tuple %v25
  %27 = xla_tuple %26
  %v28 = vxor.u32 %v25, 2147483648
  %29 = xla_tuple %v28
  %s30 = scalar_lea.vmem %s1, 4
  %31 = vst [vmem:[%s30] sm:$0xf] %v28
  %s32 = scalar_lea.vmem %s0, 16
  %v33 = vld [vmem:[%s32] sm:$0xf]
  %34 = xla_tuple %v33
  %35 = xla_tuple %34
  %v36 = vxor.u32 %v33, 2147483648
  %37 = xla_tuple %v36
  %s38 = scalar_lea.vmem %s1, 16
  %39 = vst [vmem:[%s38] sm:$0xf] %v36
  %s40 = scalar_lea.vmem %s0, 28
  %v41 = vld [vmem:[%s40] sm:$0xf]
  %42 = xla_tuple %v41
  %43 = xla_tuple %42
  %v44 = vxor.u32 %v41, 2147483648
  %45 = xla_tuple %v44
  %s46 = scalar_lea.vmem %s1, 28
  %47 = vst [vmem:[%s46] sm:$0xf] %v44
  %s48 = scalar_lea.vmem %s0, 8
  %v49 = vld [vmem:[%s48] sm:$0xf]
  %50 = xla_tuple %v49
  %51 = xla_tuple %50
  %v52 = vxor.u32 %v49, 2147483648
  %53 = xla_tuple %v52
  %s54 = scalar_lea.vmem %s1, 8
  %55 = vst [vmem:[%s54] sm:$0xf] %v52
  %s56 = scalar_lea.vmem %s0, 20
  %v57 = vld [vmem:[%s56] sm:$0xf]
  %58 = xla_tuple %v57
  %59 = xla_tuple %58
  %v60 = vxor.u32 %v57, 2147483648
  %61 = xla_tuple %v60
  %s62 = scalar_lea.vmem %s1, 20
  %63 = vst [vmem:[%s62] sm:$0xf] %v60
  %s64 = scalar_lea.vmem %s0, 32
  %v65 = vld [vmem:[%s64] sm:$0xf]
  %66 = xla_tuple %v65
  %67 = xla_tuple %66
  %v68 = vxor.u32 %v65, 2147483648
  %69 = xla_tuple %v68
  %s70 = scalar_lea.vmem %s1, 32
  %71 = vst [vmem:[%s70] sm:$0xf] %v68

// kernel: custom-call.2
$region0: #{custom-call.2}
  %s0 = inlined_call_operand.vmem [shape: f32[2,4,16,16], index: 0, kind: input, shape index: {}]
  %s1 = inlined_call_operand.vmem [shape: f32[2,4,16,16], index: 1, kind: input, shape index: {}]
  %s2 = inlined_call_operand.hbm [shape: c64[2,4,16,16], index: 2, kind: output, shape index: {}]
  %s3 = scalar_lea.hbm %s2, 2048
  $region1: #{custom-call.2} parent=0
    #allocation0 [shape = 's32[1]{0}', space=sflag, size = 0x4, scoped, tag = 'scoped memory for custom-call.2']
    %4 = vsyncpa [#allocation0], 0
    %s5 = sshll.u32 %s0, 4
    %s6 = int_to_ptr.vmem [resolvable:$true] %s5
    %8 = dma.vmem_to_hbm [thread:$0]  %s6, 2048, %s2, [#allocation0]
    %9 = dma.done [#allocation0], 2048
    %10 = vsyncpa [#allocation0], 1
  $region2: #{custom-call.2} parent=0
    #allocation1 [shape = 's32[1]{0}', space=sflag, size = 0x4, scoped, tag = 'scoped memory for custom-call.2']
    %11 = vsyncpa [#allocation1], 0
    %s12 = sshll.u32 %s1, 4
    %s13 = int_to_ptr.vmem [resolvable:$true] %s12
    %15 = dma.vmem_to_hbm [thread:$0]  %s13, 2048, %s3, [#allocation1]
    %16 = dma.done [#allocation1], 2048
    %17 = vsyncpa [#allocation1], 1

// kernel: conv_block_forward.1
$region0: #{conv_block_forward.1}
  #allocation0 [shape = 'u32[]', space=smem, size = 0x4, offset = 0x4, fixed_abs, tag = 'smem constant byte address 0x4 - core index']
  #allocation1 [shape = 'u32[144,128]{1,0:T(1,128)}', space=vmem, size = 0x12000, scoped, tag = 'internal scratch']
  %s0 = inlined_call_operand.vmem [shape: f32[2,2,10,18,8], index: 0, kind: input, shape index: {}]
  %s1 = inlined_call_operand.vmem [shape: f32[8,72], index: 1, kind: input, shape index: {}]
  %s2 = inlined_call_operand.vmem [shape: f32[8,1], index: 2, kind: input, shape index: {}]
  %s3 = inlined_call_operand.vmem [shape: f32[2,8,256], index: 3, kind: output, shape index: {}]
  %s4 = sld [smem:[#allocation0]]
  $region45: #{conv_block_forward.1} parent=0
    _
  %s6 = ssub.s32 1, %s4
  %s7 = scalar_select 0, %s6, %s4
  loop: start=0, step=1, limit=6
  $region2: #{conv_block_forward.1} parent=0 // loop_pre_header
    _
  $region3: #{conv_block_forward.1} parent=0 // loop_header
    %s9 = sphi 0, %s13
    %p10 = scmp.ge.s32.totalorder %s9, 6
    %s16 = sphi 0, %s28
    %s17 = sphi 0, %s24
    %s18 = sphi 0, %s16
    %s19 = sphi 0, %s17
    %s20 = sphi 0, %s18
    %s21 = sphi 0, %s19
    %s33 = sphi 0, %s35
    %s36 = sphi 0, %s33
    %s37 = sphi 0, %s36
    %s53 = sphi 0, %s37
    %s57 = sphi 0, %s57
    %s59 = sphi 0, %s57
    %s60 = sphi 0, %s59
    %s74 = sphi 0, %s60
    %s78 = sphi 0, %s78
    %s80 = sphi 0, %s78
    %s81 = sphi 0, %s80
    %s95 = sphi 0, %s81
    %s103 = sphi 0, %s105
    %s106 = sphi 0, %s103
    %s107 = sphi 0, %s106
    %s123 = sphi 0, %s107
  $region4: #{conv_block_forward.1} parent=0 // loop_header_branch
    %12 = sbr.rel (%p10) target = $region8
  $region5: #{conv_block_forward.1} parent=0 // loop_body
    %s14 = ssub.s32 %s9, 1
    %s15 = ssub.s32 %s9, 2
    %s22 = sadd.s32 1, %s17
    %p23 = scmp.ge.s32.totalorder %s22, 2
    %s24 = scalar_select %p23, 0, %s22
    %s25 = sadd.s32 1, %s16
    %s26 = scalar_select %p23, %s25, %s16
    %p27 = scmp.ge.s32.totalorder %s26, 2
    %s28 = scalar_select %p27, 0, %s26
    %s29 = ssub.s32 %s16, %s28
    %s30 = ssub.s32 %s17, %s24
    %s31 = sor.u32 %s29, %s30
    %p32 = scmp.eq.s32.totalorder %s31, 0
    %s34 = sadd.s32 %s33, 1
    %s35 = scalar_select %p32, %s33, %s34
    %p38 = pneg %p32
    %p39 = scmp.eq.s32.totalorder %s9, 3
    %p40 = por %p38, %p39
    %p41 = scmp.ne.s32.totalorder %s33, %s36
    %p42 = scmp.eq.s32.totalorder %s9, 0
    %p43 = por %p41, %p42
    %p44 = scmp.ne.s32.totalorder %s33, %s36
    %p45 = scmp.eq.s32.totalorder %s14, 3
    %p46 = por %p44, %p45
    %p47 = scmp.ne.s32.totalorder %s36, %s37
    %p48 = scmp.eq.s32.totalorder %s14, 0
    %p49 = por %p47, %p48
    %p50 = scmp.ne.s32.totalorder %s36, %s37
    %p51 = scmp.eq.s32.totalorder %s15, 3
    %p52 = por %p50, %p51
    %p54 = scmp.ne.s32.totalorder %s37, %s53
    %p55 = scmp.eq.s32.totalorder %s15, 0
    %p56 = por %p54, %p55
    %s58 = sadd.s32 %s57, 1
    %p61 = scmp.eq.s32.totalorder %s9, 3
    %p62 = scmp.ne.s32.totalorder %s57, %s59
    %p63 = scmp.eq.s32.totalorder %s9, 0
    %p64 = por %p62, %p63
    %p65 = scmp.ne.s32.totalorder %s57, %s59
    %p66 = scmp.eq.s32.totalorder %s14, 3
    %p67 = por %p65, %p66
    %p68 = scmp.ne.s32.totalorder %s59, %s60
    %p69 = scmp.eq.s32.totalorder %s14, 0
    %p70 = por %p68, %p69
    %p71 = scmp.ne.s32.totalorder %s59, %s60
    %p72 = scmp.eq.s32.totalorder %s15, 3
    %p73 = por %p71, %p72
    %p75 = scmp.ne.s32.totalorder %s60, %s74
    %p76 = scmp.eq.s32.totalorder %s15, 0
    %p77 = por %p75, %p76
    %s79 = sadd.s32 %s78, 1
    %p82 = scmp.eq.s32.totalorder %s9, 3
    %p83 = scmp.ne.s32.totalorder %s78, %s80
    %p84 = scmp.eq.s32.totalorder %s9, 0
    %p85 = por %p83, %p84
    %p86 = scmp.ne.s32.totalorder %s78, %s80
    %p87 = scmp.eq.s32.totalorder %s14, 3
    %p88 = por %p86, %p87
    %p89 = scmp.ne.s32.totalorder %s80, %s81
    %p90 = scmp.eq.s32.totalorder %s14, 0
    %p91 = por %p89, %p90
    %p92 = scmp.ne.s32.totalorder %s80, %s81
    %p93 = scmp.eq.s32.totalorder %s15, 3
    %p94 = por %p92, %p93
    %p96 = scmp.ne.s32.totalorder %s81, %s95
    %p97 = scmp.eq.s32.totalorder %s15, 0
    %p98 = por %p96, %p97
    %s99 = ssub.s32 %s16, %s28
    %s100 = ssub.s32 %s17, %s24
    %s101 = sor.u32 %s99, %s100
    %p102 = scmp.eq.s32.totalorder %s101, 0
    %s104 = sadd.s32 %s103, 1
    %s105 = scalar_select %p102, %s103, %s104
    %p108 = pneg %p102
    %p109 = scmp.eq.s32.totalorder %s9, 3
    %p110 = por %p108, %p109
    %p111 = scmp.ne.s32.totalorder %s103, %s106
    %p112 = scmp.eq.s32.totalorder %s9, 0
    %p113 = por %p111, %p112
    %p114 = scmp.ne.s32.totalorder %s103, %s106
    %p115 = scmp.eq.s32.totalorder %s14, 3
    %p116 = por %p114, %p115
    %p117 = scmp.ne.s32.totalorder %s106, %s107
    %p118 = scmp.eq.s32.totalorder %s14, 0
    %p119 = por %p117, %p118
    %p120 = scmp.ne.s32.totalorder %s106, %s107
    %p121 = scmp.eq.s32.totalorder %s15, 3
    %p122 = por %p120, %p121
    %p124 = scmp.ne.s32.totalorder %s107, %s123
    %p125 = scmp.eq.s32.totalorder %s15, 0
    %p126 = por %p124, %p125
    %p127 = scmp.le.s32.totalorder 1, %s9
    %p128 = scmp.lt.s32.totalorder %s9, 5
    %p129 = pnand %p127, %p128
    %p130 = pneg %p129
    // Predicated region
    $region9: #{conv_block_forward.1} parent=5 // pred_check
      _
    $region10: #{conv_block_forward.1} parent=5 // pred_check_branch
      %132 = sbr.rel (%p129) target = $region12
    $region11: #{conv_block_forward.1} parent=5 // pred_region
      %s133 = ssub.s32 %s9, 1
      // Predicated region
      $region13: #{conv_block_forward.1} parent=11 // pred_check
        %p134 = pneg %p70
      $region14: #{conv_block_forward.1} parent=11 // pred_check_branch
        %136 = sbr.rel (%p134) target = $region16
      $region15: #{conv_block_forward.1} parent=11 // pred_region
        _
      $region16: #{conv_block_forward.1} parent=11 // pred_fallthru
        _
      // Predicated region
      $region17: #{conv_block_forward.1} parent=11 // pred_check
        %p137 = pneg %p91
      $region18: #{conv_block_forward.1} parent=11 // pred_check_branch
        %139 = sbr.rel (%p137) target = $region20
      $region19: #{conv_block_forward.1} parent=11 // pred_region
        _
      $region20: #{conv_block_forward.1} parent=11 // pred_fallthru
        _
    $region12: #{conv_block_forward.1} parent=5 // pred_fallthru
      _
    %p140 = scmp.lt.s32.totalorder %s9, 4
    // Predicated region
    $region21: #{conv_block_forward.1} parent=5 // pred_check
      %p141 = pneg %p140
    $region22: #{conv_block_forward.1} parent=5 // pred_check_branch
      %143 = sbr.rel (%p141) target = $region24
    $region23: #{conv_block_forward.1} parent=5 // pred_region
      // Predicated region
      $region25: #{conv_block_forward.1} parent=23 // pred_check
        %p144 = pneg %p43
      $region26: #{conv_block_forward.1} parent=23 // pred_check_branch
        %146 = sbr.rel (%p144) target = $region28
      $region27: #{conv_block_forward.1} parent=23 // pred_region
        %p147 = scmp.lt.s32.totalorder %s16, 1
        %s148 = scalar_select %p147, %s16, 1
        %p149 = scmp.lt.s32.totalorder %s17, 1
        %s150 = scalar_select %p149, %s17, 1
        %s151 = smul.addr %s150, 30
        %s152 = smul.addr %s148, 60
        %s153 = sadd.s32 %s151, %s152
        %s154 = smul.addr %s153, 8
        %s155 = scalar_lea.vmem %s0, %s154
      $region28: #{conv_block_forward.1} parent=23 // pred_fallthru
        _
    $region24: #{conv_block_forward.1} parent=5 // pred_fallthru
      _
    %p156 = scmp.le.s32.totalorder 1, %s9
    %p157 = scmp.lt.s32.totalorder %s9, 5
    %p158 = pnand %p156, %p157
    %p159 = pneg %p158
    // Predicated region
    $region29: #{conv_block_forward.1} parent=5 // pred_check
      _
    $region30: #{conv_block_forward.1} parent=5 // pred_check_branch
      %161 = sbr.rel (%p158) target = $region32
    $region31: #{conv_block_forward.1} parent=5 // pred_region
      %s162 = ssub.s32 %s9, 1
      %p163 = scmp.lt.s32.totalorder %s18, 1
      %s164 = scalar_select %p163, %s18, 1
      %p165 = scmp.lt.s32.totalorder %s19, 1
      %s166 = scalar_select %p165, %s19, 1
      %s167 = smul.addr %s166, 30
      %s168 = smul.addr %s164, 60
      %s169 = sadd.s32 %s167, %s168
      %s170 = smul.addr %s169, 8
      %s171 = scalar_lea.vmem %s0, %s170
      %p172 = pneg %p49
      %p173 = pneg %p46
      %p174 = pneg %p70
      %p175 = pneg %p67
      %p176 = pneg %p91
      %p177 = pneg %p88
      %p178 = pneg %p119
      %p179 = pneg %p116
      %p180 = scmp.lt.s32.totalorder %s18, 1
      %s181 = scalar_select %p180, %s18, 1
      %p182 = scmp.lt.s32.totalorder %s19, 1
      %s183 = scalar_select %p182, %s19, 1
      %s184 = smul.addr %s181, 2
      %s185 = sadd.s32 %s183, %s184
      %s186 = smul.addr %s185, 8
      %s187 = scalar_lea.vmem %s3, %s186
      %p188 = scmp.lt.s32.totalorder %s18, 1
      %s189 = scalar_select %p188, %s18, 1
      %p190 = scmp.lt.s32.totalorder %s19, 1
      %s191 = scalar_select %p190, %s19, 1
      %s192 = smul.addr %s191, 30
      %s193 = smul.addr %s189, 60
      %s194 = sadd.s32 %s192, %s193
      %s195 = smul.addr %s194, 8
      %s196 = scalar_lea.vmem %s0, %s195
      %p197 = scmp.lt.s32.totalorder %s18, 1
      %s198 = scalar_select %p197, %s18, 1
      %p199 = scmp.lt.s32.totalorder %s19, 1
      %s200 = scalar_select %p199, %s19, 1
      %s201 = smul.addr %s198, 2
      %s202 = sadd.s32 %s200, %s201
      %s203 = smul.addr %s202, 8
      %s204 = scalar_lea.vmem %s3, %s203
      %v205 = vld [vmem:[%s196] sm:$0xff]
      %v206 = vld [vmem:[%s196 + $0x8] sm:$0xff]
      %v207 = vld [vmem:[%s196 + $0x10] sm:$0x3]
      %v208 = vld [vmem:[%s196 + $0x18] sm:$0xff]
      %v209 = vld [vmem:[%s196 + $0x20] sm:$0xff]
      %v210 = vld [vmem:[%s196 + $0x28] sm:$0x3]
      %v211 = vld [vmem:[%s196 + $0x30] sm:$0xff]
      %v212 = vld [vmem:[%s196 + $0x38] sm:$0xff]
      %v213 = vld [vmem:[%s196 + $0x40] sm:$0x3]
      %v214 = vld [vmem:[%s196 + $0x48] sm:$0xff]
      %v215 = vld [vmem:[%s196 + $0x50] sm:$0xff]
      %v216 = vld [vmem:[%s196 + $0x58] sm:$0x3]
      %v217 = vld [vmem:[%s196 + $0x60] sm:$0xff]
      %v218 = vld [vmem:[%s196 + $0x68] sm:$0xff]
      %v219 = vld [vmem:[%s196 + $0x70] sm:$0x3]
      %v220 = vld [vmem:[%s196 + $0x78] sm:$0xff]
      %v221 = vld [vmem:[%s196 + $0x80] sm:$0xff]
      %v222 = vld [vmem:[%s196 + $0x88] sm:$0x3]
      %v223 = vld [vmem:[%s196 + $0x90] sm:$0xff]
      %v224 = vld [vmem:[%s196 + $0x98] sm:$0xff]
      %v225 = vld [vmem:[%s196 + $0xa0] sm:$0x3]
      %v226 = vld [vmem:[%s196 + $0xa8] sm:$0xff]
      %v227 = vld [vmem:[%s196 + $0xb0] sm:$0xff]
      %v228 = vld [vmem:[%s196 + $0xb8] sm:$0x3]
      %v229 = vld [vmem:[%s196 + $0xc0] sm:$0xff]
      %v230 = vld [vmem:[%s196 + $0xc8] sm:$0xff]
      %v231 = vld [vmem:[%s196 + $0xd0] sm:$0x3]
      %v232 = vld [vmem:[%s196 + $0xd8] sm:$0xff]
      %v233 = vld [vmem:[%s196 + $0xe0] sm:$0xff]
      %v234 = vld [vmem:[%s196 + $0xe8] sm:$0x3]
      %v235 = vmax.f32 %v205, 0.0
      %v236 = vmax.f32 %v206, 0.0
      %v237 = vmax.f32 %v207, 0.0
      %v238 = vmax.f32 %v208, 0.0
      %v239 = vmax.f32 %v209, 0.0
      %v240 = vmax.f32 %v210, 0.0
      %v241 = vmax.f32 %v211, 0.0
      %v242 = vmax.f32 %v212, 0.0
      %v243 = vmax.f32 %v213, 0.0
      %v244 = vmax.f32 %v214, 0.0
      %v245 = vmax.f32 %v215, 0.0
      %v246 = vmax.f32 %v216, 0.0
      %v247 = vmax.f32 %v217, 0.0
      %v248 = vmax.f32 %v218, 0.0
      %v249 = vmax.f32 %v219, 0.0
      %v250 = vmax.f32 %v220, 0.0
      %v251 = vmax.f32 %v221, 0.0
      %v252 = vmax.f32 %v222, 0.0
      %v253 = vmax.f32 %v223, 0.0
      %v254 = vmax.f32 %v224, 0.0
      %v255 = vmax.f32 %v225, 0.0
      %v256 = vmax.f32 %v226, 0.0
      %v257 = vmax.f32 %v227, 0.0
      %v258 = vmax.f32 %v228, 0.0
      %v259 = vmax.f32 %v229, 0.0
      %v260 = vmax.f32 %v230, 0.0
      %v261 = vmax.f32 %v231, 0.0
      %v262 = vmax.f32 %v232, 0.0
      %v263 = vmax.f32 %v233, 0.0
      %v264 = vmax.f32 %v234, 0.0
      %vm289 = vcmask 1046528
      %v290 = vrot.slane %v235, 1
      %v291 = vrot.slane %v236, 1
      %v292 = vsel %vm289, %v290, %v291
      %v293 = vrot.slane %v237, 1
      %v294 = vsel %vm289, %v291, %v293
      %v295 = vrot.slane %v238, 1
      %v296 = vrot.slane %v239, 1
      %v297 = vsel %vm289, %v295, %v296
      %v298 = vrot.slane %v240, 1
      %v299 = vsel %vm289, %v296, %v298
      %v300 = vrot.slane %v241, 1
      %v301 = vrot.slane %v242, 1
      %v302 = vsel %vm289, %v300, %v301
      %v303 = vrot.slane %v243, 1
      %v304 = vsel %vm289, %v301, %v303
      %v305 = vrot.slane %v244, 1
      %v306 = vrot.slane %v245, 1
      %v307 = vsel %vm289, %v305, %v306
      %v308 = vrot.slane %v246, 1
      %v309 = vsel %vm289, %v306, %v308
      %v310 = vrot.slane %v247, 1
      %v311 = vrot.slane %v248, 1
      %v312 = vsel %vm289, %v310, %v311
      %v313 = vrot.slane %v249, 1
      %v314 = vsel %vm289, %v311, %v313
      %v315 = vrot.slane %v250, 1
      %v316 = vrot.slane %v251, 1
      %v317 = vsel %vm289, %v315, %v316
      %v318 = vrot.slane %v252, 1
      %v319 = vsel %vm289, %v316, %v318
      %v320 = vrot.slane %v253, 1
      %v321 = vrot.slane %v254, 1
      %v322 = vsel %vm289, %v320, %v321
      %v323 = vrot.slane %v255, 1
      %v324 = vsel %vm289, %v321, %v323
      %v325 = vrot.slane %v256, 1
      %v326 = vrot.slane %v257, 1
      %v327 = vsel %vm289, %v325, %v326
      %v328 = vrot.slane %v258, 1
      %v329 = vsel %vm289, %v326, %v328
      %vm330 = vcmask 1045504
      %v331 = vrot.slane %v235, 2
      %v332 = vrot.slane %v236, 2
      %v333 = vsel %vm330, %v331, %v332
      %v334 = vrot.slane %v237, 2
      %v335 = vsel %vm330, %v332, %v334
      %v336 = vrot.slane %v238, 2
      %v337 = vrot.slane %v239, 2
      %v338 = vsel %vm330, %v336, %v337
      %v339 = vrot.slane %v240, 2
      %v340 = vsel %vm330, %v337, %v339
      %v341 = vrot.slane %v241, 2
      %v342 = vrot.slane %v242, 2
      %v343 = vsel %vm330, %v341, %v342
      %v344 = vrot.slane %v243, 2
      %v345 = vsel %vm330, %v342, %v344
      %v346 = vrot.slane %v244, 2
      %v347 = vrot.slane %v245, 2
      %v348 = vsel %vm330, %v346, %v347
      %v349 = vrot.slane %v246, 2
      %v350 = vsel %vm330, %v347, %v349
      %v351 = vrot.slane %v247, 2
      %v352 = vrot.slane %v248, 2
      %v353 = vsel %vm330, %v351, %v352
      %v354 = vrot.slane %v249, 2
      %v355 = vsel %vm330, %v352, %v354
      %v356 = vrot.slane %v250, 2
      %v357 = vrot.slane %v251, 2
      %v358 = vsel %vm330, %v356, %v357
      %v359 = vrot.slane %v252, 2
      %v360 = vsel %vm330, %v357, %v359
      %v361 = vrot.slane %v253, 2
      %v362 = vrot.slane %v254, 2
      %v363 = vsel %vm330, %v361, %v362
      %v364 = vrot.slane %v255, 2
      %v365 = vsel %vm330, %v362, %v364
      %v366 = vrot.slane %v256, 2
      %v367 = vrot.slane %v257, 2
      %v368 = vsel %vm330, %v366, %v367
      %v369 = vrot.slane %v258, 2
      %v370 = vsel %vm330, %v367, %v369
      %v374 = vrot.slane %v259, 1
      %v375 = vrot.slane %v260, 1
      %v376 = vsel %vm289, %v374, %v375
      %v377 = vrot.slane %v261, 1
      %v378 = vsel %vm289, %v375, %v377
      %v379 = vrot.slane %v259, 2
      %v380 = vrot.slane %v260, 2
      %v381 = vsel %vm330, %v379, %v380
      %v382 = vrot.slane %v261, 2
      %v383 = vsel %vm330, %v380, %v382
      %v387 = vrot.slane %v262, 1
      %v388 = vrot.slane %v263, 1
      %v389 = vsel %vm289, %v387, %v388
      %v390 = vrot.slane %v264, 1
      %v391 = vsel %vm289, %v388, %v390
      %v392 = vrot.slane %v262, 2
      %v393 = vrot.slane %v263, 2
      %v394 = vsel %vm330, %v392, %v393
      %v395 = vrot.slane %v264, 2
      %v396 = vsel %vm330, %v393, %v395
      %397 = vrot.lane.b32.xlu0 %v292, 8
      %v398 = vpop.permute.xlu0 %397
      %399 = vrot.lane.b32.xlu0 %v294, 8
      %v400 = vpop.permute.xlu0 %399
      %401 = vrot.lane.b32.xlu0 %v297, 8
      %v402 = vpop.permute.xlu0 %401
      %403 = vrot.lane.b32.xlu0 %v299, 8
      %v404 = vpop.permute.xlu0 %403
      %405 = vrot.lane.b32.xlu0 %v302, 8
      %v406 = vpop.permute.xlu0 %405
      %407 = vrot.lane.b32.xlu0 %v304, 8
      %v408 = vpop.permute.xlu0 %407
      %409 = vrot.lane.b32.xlu0 %v307, 8
      %v410 = vpop.permute.xlu0 %409
      %411 = vrot.lane.b32.xlu0 %v309, 8
      %v412 = vpop.permute.xlu0 %411
      %413 = vrot.lane.b32.xlu0 %v312, 8
      %v414 = vpop.permute.xlu0 %413
      %415 = vrot.lane.b32.xlu0 %v314, 8
      %v416 = vpop.permute.xlu0 %415
      %417 = vrot.lane.b32.xlu0 %v317, 8
      %v418 = vpop.permute.xlu0 %417
      %419 = vrot.lane.b32.xlu0 %v319, 8
      %v420 = vpop.permute.xlu0 %419
      %421 = vrot.lane.b32.xlu0 %v322, 8
      %v422 = vpop.permute.xlu0 %421
      %423 = vrot.lane.b32.xlu0 %v324, 8
      %v424 = vpop.permute.xlu0 %423
      %425 = vrot.lane.b32.xlu0 %v327, 8
      %v426 = vpop.permute.xlu0 %425
      %427 = vrot.lane.b32.xlu0 %v329, 8
      %v428 = vpop.permute.xlu0 %427
      %445 = vrot.lane.b32.xlu0 %v333, 16
      %v446 = vpop.permute.xlu0 %445
      %447 = vrot.lane.b32.xlu0 %v335, 16
      %v448 = vpop.permute.xlu0 %447
      %449 = vrot.lane.b32.xlu0 %v338, 16
      %v450 = vpop.permute.xlu0 %449
      %451 = vrot.lane.b32.xlu0 %v340, 16
      %v452 = vpop.permute.xlu0 %451
      %453 = vrot.lane.b32.xlu0 %v343, 16
      %v454 = vpop.permute.xlu0 %453
      %455 = vrot.lane.b32.xlu0 %v345, 16
      %v456 = vpop.permute.xlu0 %455
      %457 = vrot.lane.b32.xlu0 %v348, 16
      %v458 = vpop.permute.xlu0 %457
      %459 = vrot.lane.b32.xlu0 %v350, 16
      %v460 = vpop.permute.xlu0 %459
      %461 = vrot.lane.b32.xlu0 %v353, 16
      %v462 = vpop.permute.xlu0 %461
      %463 = vrot.lane.b32.xlu0 %v355, 16
      %v464 = vpop.permute.xlu0 %463
      %465 = vrot.lane.b32.xlu0 %v358, 16
      %v466 = vpop.permute.xlu0 %465
      %467 = vrot.lane.b32.xlu0 %v360, 16
      %v468 = vpop.permute.xlu0 %467
      %469 = vrot.lane.b32.xlu0 %v363, 16
      %v470 = vpop.permute.xlu0 %469
      %471 = vrot.lane.b32.xlu0 %v365, 16
      %v472 = vpop.permute.xlu0 %471
      %473 = vrot.lane.b32.xlu0 %v368, 16
      %v474 = vpop.permute.xlu0 %473
      %475 = vrot.lane.b32.xlu0 %v370, 16
      %v476 = vpop.permute.xlu0 %475
      %493 = vrot.lane.b32.xlu0 %v238, 24
      %v494 = vpop.permute.xlu0 %493
      %495 = vrot.lane.b32.xlu0 %v239, 24
      %v496 = vpop.permute.xlu0 %495
      %497 = vrot.lane.b32.xlu0 %v241, 24
      %v498 = vpop.permute.xlu0 %497
      %499 = vrot.lane.b32.xlu0 %v242, 24
      %v500 = vpop.permute.xlu0 %499
      %501 = vrot.lane.b32.xlu0 %v244, 24
      %v502 = vpop.permute.xlu0 %501
      %503 = vrot.lane.b32.xlu0 %v245, 24
      %v504 = vpop.permute.xlu0 %503
      %505 = vrot.lane.b32.xlu0 %v247, 24
      %v506 = vpop.permute.xlu0 %505
      %507 = vrot.lane.b32.xlu0 %v248, 24
      %v508 = vpop.permute.xlu0 %507
      %509 = vrot.lane.b32.xlu0 %v250, 24
      %v510 = vpop.permute.xlu0 %509
      %511 = vrot.lane.b32.xlu0 %v251, 24
      %v512 = vpop.permute.xlu0 %511
      %513 = vrot.lane.b32.xlu0 %v253, 24
      %v514 = vpop.permute.xlu0 %513
      %515 = vrot.lane.b32.xlu0 %v254, 24
      %v516 = vpop.permute.xlu0 %515
      %517 = vrot.lane.b32.xlu0 %v256, 24
      %v518 = vpop.permute.xlu0 %517
      %519 = vrot.lane.b32.xlu0 %v257, 24
      %v520 = vpop.permute.xlu0 %519
      %521 = vrot.lane.b32.xlu0 %v259, 24
      %v522 = vpop.permute.xlu0 %521
      %523 = vrot.lane.b32.xlu0 %v260, 24
      %v524 = vpop.permute.xlu0 %523
      %541 = vrot.lane.b32.xlu0 %v297, 32
      %v542 = vpop.permute.xlu0 %541
      %543 = vrot.lane.b32.xlu0 %v299, 32
      %v544 = vpop.permute.xlu0 %543
      %545 = vrot.lane.b32.xlu0 %v302, 32
      %v546 = vpop.permute.xlu0 %545
      %547 = vrot.lane.b32.xlu0 %v304, 32
      %v548 = vpop.permute.xlu0 %547
      %549 = vrot.lane.b32.xlu0 %v307, 32
      %v550 = vpop.permute.xlu0 %549
      %551 = vrot.lane.b32.xlu0 %v309, 32
      %v552 = vpop.permute.xlu0 %551
      %553 = vrot.lane.b32.xlu0 %v312, 32
      %v554 = vpop.permute.xlu0 %553
      %555 = vrot.lane.b32.xlu0 %v314, 32
      %v556 = vpop.permute.xlu0 %555
      %557 = vrot.lane.b32.xlu0 %v317, 32
      %v558 = vpop.permute.xlu0 %557
      %559 = vrot.lane.b32.xlu0 %v319, 32
      %v560 = vpop.permute.xlu0 %559
      %561 = vrot.lane.b32.xlu0 %v322, 32
      %v562 = vpop.permute.xlu0 %561
      %563 = vrot.lane.b32.xlu0 %v324, 32
      %v564 = vpop.permute.xlu0 %563
      %565 = vrot.lane.b32.xlu0 %v327, 32
      %v566 = vpop.permute.xlu0 %565
      %567 = vrot.lane.b32.xlu0 %v329, 32
      %v568 = vpop.permute.xlu0 %567
      %569 = vrot.lane.b32.xlu0 %v376, 32
      %v570 = vpop.permute.xlu0 %569
      %571 = vrot.lane.b32.xlu0 %v378, 32
      %v572 = vpop.permute.xlu0 %571
      %589 = vrot.lane.b32.xlu0 %v338, 40
      %v590 = vpop.permute.xlu0 %589
      %591 = vrot.lane.b32.xlu0 %v340, 40
      %v592 = vpop.permute.xlu0 %591
      %593 = vrot.lane.b32.xlu0 %v343, 40
      %v594 = vpop.permute.xlu0 %593
      %595 = vrot.lane.b32.xlu0 %v345, 40
      %v596 = vpop.permute.xlu0 %595
      %597 = vrot.lane.b32.xlu0 %v348, 40
      %v598 = vpop.permute.xlu0 %597
      %599 = vrot.lane.b32.xlu0 %v350, 40
      %v600 = vpop.permute.xlu0 %599
      %601 = vrot.lane.b32.xlu0 %v353, 40
      %v602 = vpop.permute.xlu0 %601
      %603 = vrot.lane.b32.xlu0 %v355, 40
      %v604 = vpop.permute.xlu0 %603
      %605 = vrot.lane.b32.xlu0 %v358, 40
      %v606 = vpop.permute.xlu0 %605
      %607 = vrot.lane.b32.xlu0 %v360, 40
      %v608 = vpop.permute.xlu0 %607
      %609 = vrot.lane.b32.xlu0 %v363, 40
      %v610 = vpop.permute.xlu0 %609
      %611 = vrot.lane.b32.xlu0 %v365, 40
      %v612 = vpop.permute.xlu0 %611
      %613 = vrot.lane.b32.xlu0 %v368, 40
      %v614 = vpop.permute.xlu0 %613
      %615 = vrot.lane.b32.xlu0 %v370, 40
      %v616 = vpop.permute.xlu0 %615
      %617 = vrot.lane.b32.xlu0 %v381, 40
      %v618 = vpop.permute.xlu0 %617
      %619 = vrot.lane.b32.xlu0 %v383, 40
      %v620 = vpop.permute.xlu0 %619
      %637 = vrot.lane.b32.xlu0 %v241, 48
      %v638 = vpop.permute.xlu0 %637
      %639 = vrot.lane.b32.xlu0 %v242, 48
      %v640 = vpop.permute.xlu0 %639
      %641 = vrot.lane.b32.xlu0 %v244, 48
      %v642 = vpop.permute.xlu0 %641
      %643 = vrot.lane.b32.xlu0 %v245, 48
      %v644 = vpop.permute.xlu0 %643
      %645 = vrot.lane.b32.xlu0 %v247, 48
      %v646 = vpop.permute.xlu0 %645
      %647 = vrot.lane.b32.xlu0 %v248, 48
      %v648 = vpop.permute.xlu0 %647
      %649 = vrot.lane.b32.xlu0 %v250, 48
      %v650 = vpop.permute.xlu0 %649
      %651 = vrot.lane.b32.xlu0 %v251, 48
      %v652 = vpop.permute.xlu0 %651
      %653 = vrot.lane.b32.xlu0 %v253, 48
      %v654 = vpop.permute.xlu0 %653
      %655 = vrot.lane.b32.xlu0 %v254, 48
      %v656 = vpop.permute.xlu0 %655
      %657 = vrot.lane.b32.xlu0 %v256, 48
      %v658 = vpop.permute.xlu0 %657
      %659 = vrot.lane.b32.xlu0 %v257, 48
      %v660 = vpop.permute.xlu0 %659
      %661 = vrot.lane.b32.xlu0 %v259, 48
      %v662 = vpop.permute.xlu0 %661
      %663 = vrot.lane.b32.xlu0 %v260, 48
      %v664 = vpop.permute.xlu0 %663
      %665 = vrot.lane.b32.xlu0 %v262, 48
      %v666 = vpop.permute.xlu0 %665
      %667 = vrot.lane.b32.xlu0 %v263, 48
      %v668 = vpop.permute.xlu0 %667
      %685 = vrot.lane.b32.xlu0 %v302, 56
      %v686 = vpop.permute.xlu0 %685
      %687 = vrot.lane.b32.xlu0 %v304, 56
      %v688 = vpop.permute.xlu0 %687
      %689 = vrot.lane.b32.xlu0 %v307, 56
      %v690 = vpop.permute.xlu0 %689
      %691 = vrot.lane.b32.xlu0 %v309, 56
      %v692 = vpop.permute.xlu0 %691
      %693 = vrot.lane.b32.xlu0 %v312, 56
      %v694 = vpop.permute.xlu0 %693
      %695 = vrot.lane.b32.xlu0 %v314, 56
      %v696 = vpop.permute.xlu0 %695
      %697 = vrot.lane.b32.xlu0 %v317, 56
      %v698 = vpop.permute.xlu0 %697
      %699 = vrot.lane.b32.xlu0 %v319, 56
      %v700 = vpop.permute.xlu0 %699
      %701 = vrot.lane.b32.xlu0 %v322, 56
      %v702 = vpop.permute.xlu0 %701
      %703 = vrot.lane.b32.xlu0 %v324, 56
      %v704 = vpop.permute.xlu0 %703
      %705 = vrot.lane.b32.xlu0 %v327, 56
      %v706 = vpop.permute.xlu0 %705
      %707 = vrot.lane.b32.xlu0 %v329, 56
      %v708 = vpop.permute.xlu0 %707
      %709 = vrot.lane.b32.xlu0 %v376, 56
      %v710 = vpop.permute.xlu0 %709
      %711 = vrot.lane.b32.xlu0 %v378, 56
      %v712 = vpop.permute.xlu0 %711
      %713 = vrot.lane.b32.xlu0 %v389, 56
      %v714 = vpop.permute.xlu0 %713
      %715 = vrot.lane.b32.xlu0 %v391, 56
      %v716 = vpop.permute.xlu0 %715
      %733 = vrot.lane.b32.xlu0 %v343, 64
      %v734 = vpop.permute.xlu0 %733
      %735 = vrot.lane.b32.xlu0 %v345, 64
      %v736 = vpop.permute.xlu0 %735
      %737 = vrot.lane.b32.xlu0 %v348, 64
      %v738 = vpop.permute.xlu0 %737
      %739 = vrot.lane.b32.xlu0 %v350, 64
      %v740 = vpop.permute.xlu0 %739
      %741 = vrot.lane.b32.xlu0 %v353, 64
      %v742 = vpop.permute.xlu0 %741
      %743 = vrot.lane.b32.xlu0 %v355, 64
      %v744 = vpop.permute.xlu0 %743
      %745 = vrot.lane.b32.xlu0 %v358, 64
      %v746 = vpop.permute.xlu0 %745
      %747 = vrot.lane.b32.xlu0 %v360, 64
      %v748 = vpop.permute.xlu0 %747
      %749 = vrot.lane.b32.xlu0 %v363, 64
      %v750 = vpop.permute.xlu0 %749
      %751 = vrot.lane.b32.xlu0 %v365, 64
      %v752 = vpop.permute.xlu0 %751
      %753 = vrot.lane.b32.xlu0 %v368, 64
      %v754 = vpop.permute.xlu0 %753
      %755 = vrot.lane.b32.xlu0 %v370, 64
      %v756 = vpop.permute.xlu0 %755
      %757 = vrot.lane.b32.xlu0 %v381, 64
      %v758 = vpop.permute.xlu0 %757
      %759 = vrot.lane.b32.xlu0 %v383, 64
      %v760 = vpop.permute.xlu0 %759
      %761 = vrot.lane.b32.xlu0 %v394, 64
      %v762 = vpop.permute.xlu0 %761
      %763 = vrot.lane.b32.xlu0 %v396, 64
      %v764 = vpop.permute.xlu0 %763
      %vm781 = vcmask 64512
      %v782 = vsel %vm781, %v235, %v398
      %v783 = vsel %vm781, %v236, %v400
      %v784 = vsel %vm781, %v238, %v402
      %v785 = vsel %vm781, %v239, %v404
      %v786 = vsel %vm781, %v241, %v406
      %v787 = vsel %vm781, %v242, %v408
      %v788 = vsel %vm781, %v244, %v410
      %v789 = vsel %vm781, %v245, %v412
      %v790 = vsel %vm781, %v247, %v414
      %v791 = vsel %vm781, %v248, %v416
      %v792 = vsel %vm781, %v250, %v418
      %v793 = vsel %vm781, %v251, %v420
      %v794 = vsel %vm781, %v253, %v422
      %v795 = vsel %vm781, %v254, %v424
      %v796 = vsel %vm781, %v256, %v426
      %v797 = vsel %vm781, %v257, %v428
      %vm798 = vcmask 130048
      %v799 = vsel %vm798, %v782, %v446
      %v800 = vsel %vm798, %v783, %v448
      %v801 = vsel %vm798, %v784, %v450
      %v802 = vsel %vm798, %v785, %v452
      %v803 = vsel %vm798, %v786, %v454
      %v804 = vsel %vm798, %v787, %v456
      %v805 = vsel %vm798, %v788, %v458
      %v806 = vsel %vm798, %v789, %v460
      %v807 = vsel %vm798, %v790, %v462
      %v808 = vsel %vm798, %v791, %v464
      %v809 = vsel %vm798, %v792, %v466
      %v810 = vsel %vm798, %v793, %v468
      %v811 = vsel %vm798, %v794, %v470
      %v812 = vsel %vm798, %v795, %v472
      %v813 = vsel %vm798, %v796, %v474
      %v814 = vsel %vm798, %v797, %v476
      %vm815 = vcmask 195584
      %v816 = vsel %vm815, %v799, %v494
      %v817 = vsel %vm815, %v800, %v496
      %v818 = vsel %vm815, %v801, %v498
      %v819 = vsel %vm815, %v802, %v500
      %v820 = vsel %vm815, %v803, %v502
      %v821 = vsel %vm815, %v804, %v504
      %v822 = vsel %vm815, %v805, %v506
      %v823 = vsel %vm815, %v806, %v508
      %v824 = vsel %vm815, %v807, %v510
      %v825 = vsel %vm815, %v808, %v512
      %v826 = vsel %vm815, %v809, %v514
      %v827 = vsel %vm815, %v810, %v516
      %v828 = vsel %vm815, %v811, %v518
      %v829 = vsel %vm815, %v812, %v520
      %v830 = vsel %vm815, %v813, %v522
      %v831 = vsel %vm815, %v814, %v524
      %vm832 = vcmask 261120
      %v833 = vsel %vm832, %v816, %v542
      %v834 = vsel %vm832, %v817, %v544
      %v835 = vsel %vm832, %v818, %v546
      %v836 = vsel %vm832, %v819, %v548
      %v837 = vsel %vm832, %v820, %v550
      %v838 = vsel %vm832, %v821, %v552
      %v839 = vsel %vm832, %v822, %v554
      %v840 = vsel %vm832, %v823, %v556
      %v841 = vsel %vm832, %v824, %v558
      %v842 = vsel %vm832, %v825, %v560
      %v843 = vsel %vm832, %v826, %v562
      %v844 = vsel %vm832, %v827, %v564
      %v845 = vsel %vm832, %v828, %v566
      %v846 = vsel %vm832, %v829, %v568
      %v847 = vsel %vm832, %v830, %v570
      %v848 = vsel %vm832, %v831, %v572
      %vm849 = vcmask 326656
      %v850 = vsel %vm849, %v833, %v590
      %v851 = vsel %vm849, %v834, %v592
      %v852 = vsel %vm849, %v835, %v594
      %v853 = vsel %vm849, %v836, %v596
      %v854 = vsel %vm849, %v837, %v598
      %v855 = vsel %vm849, %v838, %v600
      %v856 = vsel %vm849, %v839, %v602
      %v857 = vsel %vm849, %v840, %v604
      %v858 = vsel %vm849, %v841, %v606
      %v859 = vsel %vm849, %v842, %v608
      %v860 = vsel %vm849, %v843, %v610
      %v861 = vsel %vm849, %v844, %v612
      %v862 = vsel %vm849, %v845, %v614
      %v863 = vsel %vm849, %v846, %v616
      %v864 = vsel %vm849, %v847, %v618
      %v865 = vsel %vm849, %v848, %v620
      %vm866 = vcmask 392192
      %v867 = vsel %vm866, %v850, %v638
      %v868 = vsel %vm866, %v851, %v640
      %v869 = vsel %vm866, %v852, %v642
      %v870 = vsel %vm866, %v853, %v644
      %v871 = vsel %vm866, %v854, %v646
      %v872 = vsel %vm866, %v855, %v648
      %v873 = vsel %vm866, %v856, %v650
      %v874 = vsel %vm866, %v857, %v652
      %v875 = vsel %vm866, %v858, %v654
      %v876 = vsel %vm866, %v859, %v656
      %v877 = vsel %vm866, %v860, %v658
      %v878 = vsel %vm866, %v861, %v660
      %v879 = vsel %vm866, %v862, %v662
      %v880 = vsel %vm866, %v863, %v664
      %v881 = vsel %vm866, %v864, %v666
      %v882 = vsel %vm866, %v865, %v668
      %vm883 = vcmask 457728
      %v884 = vsel %vm883, %v867, %v686
      %v885 = vsel %vm883, %v868, %v688
      %v886 = vsel %vm883, %v869, %v690
      %v887 = vsel %vm883, %v870, %v692
      %v888 = vsel %vm883, %v871, %v694
      %v889 = vsel %vm883, %v872, %v696
      %v890 = vsel %vm883, %v873, %v698
      %v891 = vsel %vm883, %v874, %v700
      %v892 = vsel %vm883, %v875, %v702
      %v893 = vsel %vm883, %v876, %v704
      %v894 = vsel %vm883, %v877, %v706
      %v895 = vsel %vm883, %v878, %v708
      %v896 = vsel %vm883, %v879, %v710
      %v897 = vsel %vm883, %v880, %v712
      %v898 = vsel %vm883, %v881, %v714
      %v899 = vsel %vm883, %v882, %v716
      %vm900 = vcmask 523264
      %v901 = vsel %vm900, %v884, %v734
      %v902 = vsel %vm900, %v885, %v736
      %v903 = vsel %vm900, %v886, %v738
      %v904 = vsel %vm900, %v887, %v740
      %v905 = vsel %vm900, %v888, %v742
      %v906 = vsel %vm900, %v889, %v744
      %v907 = vsel %vm900, %v890, %v746
      %v908 = vsel %vm900, %v891, %v748
      %v909 = vsel %vm900, %v892, %v750
      %v910 = vsel %vm900, %v893, %v752
      %v911 = vsel %vm900, %v894, %v754
      %v912 = vsel %vm900, %v895, %v756
      %v913 = vsel %vm900, %v896, %v758
      %v914 = vsel %vm900, %v897, %v760
      %v915 = vsel %vm900, %v898, %v762
      %v916 = vsel %vm900, %v899, %v764
      %v917 = vld [vmem:[%s1] sm:$0xff]
      %v918 = vld [vmem:[%s2] sm:$0xff]
      %920 = vset.pattern.permute.xlu0 0
      %921 = vperm.xlu0 %920, %v918
      %v922 = vpop.permute.xlu0 %921
      %vm924 = vcmask 588800
      %v926 = vsel %vm924, %v917, 0
      %v929 = vsel %vm924, %v901, 0
      %v932 = vsel %vm924, %v902, 0
      %v935 = vsel %vm924, %v903, 0
      %v938 = vsel %vm924, %v904, 0
      %v941 = vsel %vm924, %v905, 0
      %v944 = vsel %vm924, %v906, 0
      %v947 = vsel %vm924, %v907, 0
      %v950 = vsel %vm924, %v908, 0
      %v953 = vsel %vm924, %v909, 0
      %v956 = vsel %vm924, %v910, 0
      %v959 = vsel %vm924, %v911, 0
      %v962 = vsel %vm924, %v912, 0
      %v965 = vsel %vm924, %v913, 0
      %v968 = vsel %vm924, %v914, 0
      %v971 = vsel %vm924, %v915, 0
      %v974 = vsel %vm924, %v916, 0
      %976 = vmatprep.subr.mxu0 0.0
      %977 = vmatpush1.xpose.msra.mxu0 %v929
      %978 = vmatprep.subr.mxu0 0.0
      %979 = vmatpush1.xpose.msra.mxu0 %v932
      %980 = vmatprep.subr.mxu0 0.0
      %981 = vmatpush1.xpose.msra.mxu0 %v935
      %982 = vmatprep.subr.mxu0 0.0
      %983 = vmatpush1.xpose.msra.mxu0 %v938
      %984 = vmatprep.subr.mxu0 0.0
      %985 = vmatpush1.xpose.msra.mxu0 %v941
      %986 = vmatprep.subr.mxu0 0.0
      %987 = vmatpush1.xpose.msra.mxu0 %v944
      %988 = vmatprep.subr.mxu0 0.0
      %989 = vmatpush1.xpose.msra.mxu0 %v947
      %990 = vmatprep.subr.mxu0 0.0
      %991 = vmatpush1.xpose.msra.mxu0 %v950
      %992 = vmatprep.subr.mxu0 0.0
      %993 = vmatpush1.xpose.msra.mxu0 %v953
      %994 = vmatprep.subr.mxu0 0.0
      %995 = vmatpush1.xpose.msra.mxu0 %v956
      %996 = vmatprep.subr.mxu0 0.0
      %997 = vmatpush1.xpose.msra.mxu0 %v959
      %998 = vmatprep.subr.mxu0 0.0
      %999 = vmatpush1.xpose.msra.mxu0 %v962
      %1000 = vmatprep.subr.mxu0 0.0
      %1001 = vmatpush1.xpose.msra.mxu0 %v965
      %1002 = vmatprep.subr.mxu0 0.0
      %1003 = vmatpush1.xpose.msra.mxu0 %v968
      %1004 = vmatprep.subr.mxu0 0.0
      %1005 = vmatpush1.xpose.msra.mxu0 %v971
      %1006 = vmatprep.subr.mxu0 0.0
      %1007 = vmatpush1.xpose.msra.mxu0 %v974
      %1008 = vmatprep.subr.mxu0 0.0
      %1009 = vmatpush1.xpose.msra.mxu0 0.0
      %1010 = vmatprep.subr.mxu0 0.0
      %1011 = vmatpush1.xpose.msra.mxu0 0.0
      %1012 = vmatprep.subr.mxu0 0.0
      %1013 = vmatpush1.xpose.msra.mxu0 0.0
      %1014 = vmatprep.subr.mxu0 0.0
      %1015 = vmatpush1.xpose.msra.mxu0 0.0
      %1016 = vmatprep.subr.mxu0 0.0
      %1017 = vmatpush1.xpose.msra.mxu0 0.0
      %1018 = vmatprep.subr.mxu0 0.0
      %1019 = vmatpush1.xpose.msra.mxu0 0.0
      %1020 = vmatprep.subr.mxu0 0.0
      %1021 = vmatpush1.xpose.msra.mxu0 0.0
      %1022 = vmatprep.subr.mxu0 0.0
      %1023 = vmatpush1.xpose.msra.mxu0 0.0
      %1024 = vmatprep.subr.mxu0 0.0
      %1025 = vmatpush1.xpose.msra.mxu0 0.0
      %1026 = vmatprep.subr.mxu0 0.0
      %1027 = vmatpush1.xpose.msra.mxu0 0.0
      %1028 = vmatprep.subr.mxu0 0.0
      %1029 = vmatpush1.xpose.msra.mxu0 0.0
      %1030 = vmatprep.subr.mxu0 0.0
      %1031 = vmatpush1.xpose.msra.mxu0 0.0
      %1032 = vmatprep.subr.mxu0 0.0
      %1033 = vmatpush1.xpose.msra.mxu0 0.0
      %1034 = vmatprep.subr.mxu0 0.0
      %1035 = vmatpush1.xpose.msra.mxu0 0.0
      %1036 = vmatprep.subr.mxu0 0.0
      %1037 = vmatpush1.xpose.msra.mxu0 0.0
      %1038 = vmatprep.subr.mxu0 0.0
      %1039 = vmatpush1.xpose.msra.mxu0 0.0
      %1040 = vmatprep.mubr.f32.mxu0 0.0
      %1041 = vmatmul.mubr.f32.gmra.mrb[0].mxu0 %v926
      %v1042 = vpop.f32.mrb[0].mxu0
      %v1043 = vadd.f32 %v922, %v1042
      %v1044 = vpop.f32.mrb[0].mxu0
      %1045 = vdwg.mxu0
      %1046 = vst [vmem:[%s204] sm:$0xff] %v1043
      %p1047 = scmp.lt.s32.totalorder %s18, 1
      %s1048 = scalar_select %p1047, %s18, 1
      %p1049 = scmp.lt.s32.totalorder %s19, 1
      %s1050 = scalar_select %p1049, %s19, 1
      %s1051 = smul.addr %s1048, 2
      %s1052 = sadd.s32 %s1050, %s1051
      %s1053 = smul.addr %s1052, 8
      %s1054 = scalar_lea.vmem %s3, %s1053
      // Predicated region
      $region33: #{conv_block_forward.1} parent=31 // pred_check
        %p1055 = pneg %p116
      $region34: #{conv_block_forward.1} parent=31 // pred_check_branch
        %1057 = sbr.rel (%p1055) target = $region36
      $region35: #{conv_block_forward.1} parent=31 // pred_region
        _
      $region36: #{conv_block_forward.1} parent=31 // pred_fallthru
        _
    $region32: #{conv_block_forward.1} parent=5 // pred_fallthru
      _
    %p1058 = scmp.le.s32.totalorder 2, %s9
    // Predicated region
    $region37: #{conv_block_forward.1} parent=5 // pred_check
      %p1059 = pneg %p1058
    $region38: #{conv_block_forward.1} parent=5 // pred_check_branch
      %1061 = sbr.rel (%p1059) target = $region40
    $region39: #{conv_block_forward.1} parent=5 // pred_region
      %s1062 = ssub.s32 %s9, 2
      // Predicated region
      $region41: #{conv_block_forward.1} parent=39 // pred_check
        %p1063 = pneg %p122
      $region42: #{conv_block_forward.1} parent=39 // pred_check_branch
        %1065 = sbr.rel (%p1063) target = $region44
      $region43: #{conv_block_forward.1} parent=39 // pred_region
        %p1066 = scmp.lt.s32.totalorder %s20, 1
        %s1067 = scalar_select %p1066, %s20, 1
        %p1068 = scmp.lt.s32.totalorder %s21, 1
        %s1069 = scalar_select %p1068, %s21, 1
        %s1070 = smul.addr %s1067, 2
        %s1071 = sadd.s32 %s1069, %s1070
        %s1072 = smul.addr %s1071, 8
        %s1073 = scalar_lea.vmem %s3, %s1072
      $region44: #{conv_block_forward.1} parent=39 // pred_fallthru
        _
    $region40: #{conv_block_forward.1} parent=5 // pred_fallthru
      _
  $region6: #{conv_block_forward.1} parent=0 // loop_footer
    %s13 = sadd.s32 1, %s9
  $region7: #{conv_block_forward.1} parent=0 // loop_footer_branch
    %8 = sbr.rel target = $region3
  $region8: #{conv_block_forward.1} parent=0 // loop_exit
    _

</llo_original>
